<compile_context>
chip_gen: v7x
topology: tpu7x:2x2x1
jax: 0.10.0
libtpu: 0.0.40
codegen_flags: <defaults>
</compile_context>

<pallas_src>
import functools

import jax
import jax.numpy as jnp
from jax.experimental import pallas as pl
from jax.experimental.pallas import tpu as pltpu


def _round_up(x, m):
    return ((x + m - 1) // m) * m


def _logistics_kernel(x_ref, w_ref, b_ref, mask_ref, o_ref):
    # x_ref:   (TB, 784)  f32   (cast to bf16 here, right before the MXU op)
    # w_ref:   (784, C_PAD) bf16  (resident in VMEM across all grid steps)
    # b_ref:   (1, C_PAD) f32     (resident)
    # mask_ref:(1, C_PAD) f32     (0 for real classes, -inf for padded lanes; resident)
    # o_ref:   (TB, C_PAD) bf16
    x = x_ref[...].astype(jnp.bfloat16)

    # Linear: x @ w + b (MXU matmul with f32 accumulation).
    logits = jnp.dot(x, w_ref[...], preferred_element_type=jnp.float32) + b_ref[...]

    # ReLU, then force padded class lanes to -inf (AFTER the ReLU) so exp(-inf)=0 keeps the
    # log-softmax normalizer exact over the real classes.
    h = jnp.maximum(logits, 0.0) + mask_ref[...]

    # Numerically stable LogSoftmax over the last dim.
    m = jnp.max(h, axis=-1, keepdims=True)
    s = h - m
    lse = jnp.log(jnp.sum(jnp.exp(s), axis=-1, keepdims=True))
    o_ref[...] = (s - lse).astype(o_ref.dtype)


def prepare_params(weight, bias):
    """One-time parameter prep (hoisted out of the per-call path).

    weight: (C, 784) torch-layout f32; bias: (C,) f32.
    Returns (w_t, b2d, mask) with the class dim zero-padded to 128 lanes.
    """
    C, F = weight.shape
    C_PAD = _round_up(C, 128)  # 10 -> 128 (lane-dense output / softmax)
    w_t = jnp.pad(weight.T.astype(jnp.bfloat16), ((0, 0), (0, C_PAD - C)))
    b2d = jnp.pad(bias.astype(jnp.float32).reshape(1, C), ((0, 0), (0, C_PAD - C)))
    lane = jnp.arange(C_PAD)
    mask = jnp.where(lane < C, 0.0, -jnp.inf).astype(jnp.float32).reshape(1, C_PAD)
    return w_t, b2d, mask


def _pick_batch_tile(B, batch_tile):
    """Pad B to a multiple of 8 only; pick TB so the grid has >=2 steps when possible."""
    B8 = _round_up(max(B, 1), 8)
    if B8 <= 2 * batch_tile:
        # Split the batch into (up to) two tiles so v7x's two TensorCores both get work.
        tb = max(8, min(batch_tile, _round_up(pl.cdiv(B8, 2), 8)))
    else:
        tb = batch_tile
    return B8, tb


@functools.partial(jax.jit, static_argnames=("num_classes", "batch_tile"))
def single_layer_logistics(x_nchw, w_t, b2d, mask, *, num_classes=10, batch_tile=1024):
    """x_nchw: (B, 1, 28, 28) f32 -> (B, num_classes) f32 log-probabilities."""
    B = x_nchw.shape[0]
    F, C_PAD = w_t.shape

    # Flatten only (no cast / no K padding): kernel reads f32 directly and casts to bf16 itself.
    x2d = x_nchw.reshape(B, -1).astype(jnp.float32)

    B8, TB = _pick_batch_tile(B, batch_tile)
    if B8 != B:
        x2d = jnp.pad(x2d, ((0, B8 - B), (0, 0)))

    grid = (pl.cdiv(B8, TB),)  # last step may be partial; rows are independent

    out_padded = pl.pallas_call(
        _logistics_kernel,
        out_shape=jax.ShapeDtypeStruct((B8, C_PAD), jnp.bfloat16),
        grid=grid,
        in_specs=[
            pl.BlockSpec((TB, F), lambda i: (i, 0)),       # x: streamed f32 per batch tile
            pl.BlockSpec((F, C_PAD), lambda i: (0, 0)),    # w: resident bf16
            pl.BlockSpec((1, C_PAD), lambda i: (0, 0)),    # bias: resident f32
            pl.BlockSpec((1, C_PAD), lambda i: (0, 0)),    # class-lane mask: resident f32
        ],
        out_specs=pl.BlockSpec((TB, C_PAD), lambda i: (i, 0)),
        compiler_params=pltpu.CompilerParams(
            dimension_semantics=("parallel",),
            vmem_limit_bytes=32 * 1024 * 1024,
        ),
    )(x2d, w_t, b2d, mask)

    # Drop padded batch rows and padded class lanes (padded lanes hold -inf); return f32.
    return out_padded[:B, :num_classes].astype(jnp.float32)


if __name__ == "__main__":
    key = jax.random.PRNGKey(0)
    kx, kw, kb = jax.random.split(key, 3)

    B, C, F = 2, 10, 784
    # Input matching the module's expectation: flatten(x, 1) must give 784 features.
    x = jax.random.normal(kx, (B, 1, 28, 28), dtype=jnp.float32)

    # Deterministic parameter init (uniform in +-1/sqrt(fan_in), like torch.nn.Linear bounds).
    bound = 1.0 / jnp.sqrt(jnp.float32(F))
    weight = jax.random.uniform(kw, (C, F), minval=-bound, maxval=bound, dtype=jnp.float32)
    bias = jax.random.uniform(kb, (C,), minval=-bound, maxval=bound, dtype=jnp.float32)

    w_t, b2d, mask = prepare_params(weight, bias)
    out = single_layer_logistics(x, w_t, b2d, mask, num_classes=C)
    out = jax.block_until_ready(out)

    # Reference in plain f32 JAX (kernel uses bf16 matmul/output -> relaxed tolerance).
    ref_logits = x.reshape(B, -1) @ weight.T + bias
    ref_relu = jnp.maximum(ref_logits, 0.0)
    ref = jax.nn.log_softmax(ref_relu, axis=-1)

    assert out.shape == (B, C)
    assert bool(jnp.all(jnp.isfinite(out)))
    assert jnp.allclose(out, ref, atol=2e-2, rtol=2e-2), (out, ref)

    print("KERNEL_OK")
</pallas_src>

<mosaic_0001>
module attributes {stable_mosaic.version = 11 : i64} {
  func.func @_logistics_kernel(%arg0: i32, %arg1: memref<8x784xf32, #tpu.memory_space<vmem>>, %arg2: memref<784x128xbf16, #tpu.memory_space<vmem>>, %arg3: memref<1x128xf32, #tpu.memory_space<vmem>>, %arg4: memref<1x128xf32, #tpu.memory_space<vmem>>, %arg5: memref<8x128xbf16, #tpu.memory_space<vmem>>) attributes {dimension_semantics = [#tpu.dimension_semantics<parallel>], iteration_bounds = array<i64: 1>, scalar_prefetch = 0 : i64, scratch_operands = 0 : i64, tpu.core_type = #tpu.core_type<tc>, window_params = [{transform_indices = @transform_0, window_bounds = array<i64: 8, 784>}, {pipeline_mode = #tpu.pipeline_mode<synchronous>, transform_indices = @transform_1, window_bounds = array<i64: 784, 128>}, {pipeline_mode = #tpu.pipeline_mode<synchronous>, transform_indices = @transform_2, window_bounds = array<i64: 1, 128>}, {pipeline_mode = #tpu.pipeline_mode<synchronous>, transform_indices = @transform_3, window_bounds = array<i64: 1, 128>}, {transform_indices = @transform_4, window_bounds = array<i64: 8, 128>}]} {
    %c0 = arith.constant 0 : index
    %c0_0 = arith.constant 0 : index
    %0 = vector.load %arg1[%c0, %c0_0] : memref<8x784xf32, #tpu.memory_space<vmem>>, vector<8x784xf32>
    %1 = arith.truncf %0 : vector<8x784xf32> to vector<8x784xbf16>
    %c0_1 = arith.constant 0 : index
    %c0_2 = arith.constant 0 : index
    %2 = vector.load %arg2[%c0_1, %c0_2] : memref<784x128xbf16, #tpu.memory_space<vmem>>, vector<784x128xbf16>
    %cst = arith.constant dense<0.000000e+00> : vector<8x128xf32>
    %3 = tpu.matmul %1, %2, %cst {dimension_numbers = #tpu.dot_dimension_numbers<[1], [0], [0], [1], [0, 0, 1, 1], [], []>} : vector<8x784xbf16>, vector<784x128xbf16>, vector<8x128xf32> -> vector<8x128xf32>
    %c0_3 = arith.constant 0 : index
    %c0_4 = arith.constant 0 : index
    %4 = vector.load %arg3[%c0_3, %c0_4] : memref<1x128xf32, #tpu.memory_space<vmem>>, vector<1x128xf32>
    %5 = vector.broadcast %4 : vector<1x128xf32> to vector<8x128xf32>
    %6 = arith.addf %3, %5 : vector<8x128xf32>
    %cst_5 = arith.constant 0.000000e+00 : f32
    %7 = vector.broadcast %cst_5 : f32 to vector<8x128xf32>
    %8 = arith.maximumf %6, %7 : vector<8x128xf32>
    %c0_6 = arith.constant 0 : index
    %c0_7 = arith.constant 0 : index
    %9 = vector.load %arg4[%c0_6, %c0_7] : memref<1x128xf32, #tpu.memory_space<vmem>>, vector<1x128xf32>
    %10 = vector.broadcast %9 : vector<1x128xf32> to vector<8x128xf32>
    %11 = arith.addf %8, %10 : vector<8x128xf32>
    %cst_8 = arith.constant dense<0xFF800000> : vector<8xf32>
    %12 = vector.multi_reduction <maximumf>, %11, %cst_8 [1] : vector<8x128xf32> to vector<8xf32>
    %13 = vector.shape_cast %12 : vector<8xf32> to vector<8x1xf32>
    %14 = vector.broadcast %13 : vector<8x1xf32> to vector<8x128xf32>
    %15 = arith.subf %11, %14 : vector<8x128xf32>
    %16 = math.exp %15 : vector<8x128xf32>
    %cst_9 = arith.constant dense<0.000000e+00> : vector<8xf32>
    %17 = vector.multi_reduction <add>, %16, %cst_9 [1] : vector<8x128xf32> to vector<8xf32>
    %18 = vector.shape_cast %17 : vector<8xf32> to vector<8x1xf32>
    %19 = math.log %18 : vector<8x1xf32>
    %20 = vector.broadcast %19 : vector<8x1xf32> to vector<8x128xf32>
    %21 = arith.subf %15, %20 : vector<8x128xf32>
    %22 = arith.truncf %21 : vector<8x128xf32> to vector<8x128xbf16>
    %c0_10 = arith.constant 0 : index
    %c0_11 = arith.constant 0 : index
    %23 = vector.load %arg5[%c0_10, %c0_11] : memref<8x128xbf16, #tpu.memory_space<vmem>>, vector<8x128xbf16>
    tpu.vector_store %arg5[%c0_10, %c0_11], %22 {strides = array<i32>} : memref<8x128xbf16, #tpu.memory_space<vmem>>, vector<8x128xbf16>,
    return
  }
  func.func @transform_0(%arg0: i32) -> (i32, i32) {
    %c0_i32 = arith.constant 0 : i32
    %c0_i32_0 = arith.constant 0 : i32
    return %arg0, %c0_i32 : i32, i32
  }
  func.func @transform_1(%arg0: i32) -> (i32, i32) {
    %c0_i32 = arith.constant 0 : i32
    %c0_i32_0 = arith.constant 0 : i32
    %c0_i32_1 = arith.constant 0 : i32
    return %c0_i32, %c0_i32_0 : i32, i32
  }
  func.func @transform_2(%arg0: i32) -> (i32, i32) {
    %c0_i32 = arith.constant 0 : i32
    %c0_i32_0 = arith.constant 0 : i32
    %c0_i32_1 = arith.constant 0 : i32
    return %c0_i32, %c0_i32_0 : i32, i32
  }
  func.func @transform_3(%arg0: i32) -> (i32, i32) {
    %c0_i32 = arith.constant 0 : i32
    %c0_i32_0 = arith.constant 0 : i32
    %c0_i32_1 = arith.constant 0 : i32
    return %c0_i32, %c0_i32_0 : i32, i32
  }
  func.func @transform_4(%arg0: i32) -> (i32, i32) {
    %c0_i32 = arith.constant 0 : i32
    %c0_i32_0 = arith.constant 0 : i32
    return %arg0, %c0_i32 : i32, i32
  }
}

</mosaic_0001>

<llo_original>
// kernel: single_layer_logistics.1
$region0: #{single_layer_logistics.1}
  #allocation0 [shape = 'u32[]', space=smem, size = 0x4, offset = 0x4, fixed_abs, tag = 'smem constant byte address 0x4 - core index']
  #allocation1 [shape = 'u32[144,128]{1,0:T(1,128)}', space=vmem, size = 0x12000, scoped, tag = 'internal scratch']
  %s0 = inlined_call_operand.vmem [shape: f32[8,784], index: 0, kind: input, shape index: {}]
  %s1 = inlined_call_operand.hbm [shape: bf16[784,128], index: 1, kind: input, shape index: {}]
  %s2 = inlined_call_operand.vmem [shape: f32[1,128], index: 2, kind: input, shape index: {}]
  %s3 = inlined_call_operand.vmem [shape: f32[1,128], index: 3, kind: input, shape index: {}]
  %s4 = inlined_call_operand.vmem [shape: bf16[8,128], index: 4, kind: output, shape index: {}]
  %s5 = sld [smem:[#allocation0]]
  $region30: #{single_layer_logistics.1} parent=0
    _
  %s7 = ssub.s32 1, %s5
  %s8 = scalar_select 0, %s7, %s5
  $region1: #{single_layer_logistics.1} parent=0
    #allocation2 [shape = 'u8[200704]{0}', space=vmem, size = 0x31000, scoped, tag = 'input window, operand 1, single buffered']
    #allocation3 [shape = 's32[1]{0}', space=sflag, size = 0x4, scoped, tag = 'scoped memory for single_layer_logistics.1']
    %9 = vsyncpa [#allocation3], 0
    // Predicated region
    $region2: #{single_layer_logistics.1} parent=1 // pred_check
      _
    $region3: #{single_layer_logistics.1} parent=1 // pred_check_branch
      %11 = sbr.rel (0) target = $region5
    $region4: #{single_layer_logistics.1} parent=1 // pred_region
      _
    $region5: #{single_layer_logistics.1} parent=1 // pred_fallthru
      _
    // Predicated region
    $region6: #{single_layer_logistics.1} parent=1 // pred_check
      _
    $region7: #{single_layer_logistics.1} parent=1 // pred_check_branch
      %13 = sbr.rel (0) target = $region9
    $region8: #{single_layer_logistics.1} parent=1 // pred_region
      %s15 = ssub.s32 6272, 6272
      %16 = vsyncadd [#allocation3], %s15
      %s17 = sshll.u32 [#allocation2], 4
      %s18 = int_to_ptr.vmem [resolvable:$true] %s17
      %23 = dma.hbm_to_vmem [thread:$0]  %s1, 6272, %s18, [#allocation3], 64, 64, 4
    $region9: #{single_layer_logistics.1} parent=1 // pred_fallthru
      _
    // Predicated region
    $region10: #{single_layer_logistics.1} parent=1 // pred_check
      _
    $region11: #{single_layer_logistics.1} parent=1 // pred_check_branch
      %25 = sbr.rel (0) target = $region13
    $region12: #{single_layer_logistics.1} parent=1 // pred_region
      _
    $region13: #{single_layer_logistics.1} parent=1 // pred_fallthru
      _
    // Predicated region
    $region14: #{single_layer_logistics.1} parent=1 // pred_check
      _
    $region15: #{single_layer_logistics.1} parent=1 // pred_check_branch
      %27 = sbr.rel (0) target = $region17
    $region16: #{single_layer_logistics.1} parent=1 // pred_region
      _
    $region17: #{single_layer_logistics.1} parent=1 // pred_fallthru
      _
    // Predicated region
    $region18: #{single_layer_logistics.1} parent=1 // pred_check
      _
    $region19: #{single_layer_logistics.1} parent=1 // pred_check_branch
      %29 = sbr.rel (0) target = $region21
    $region20: #{single_layer_logistics.1} parent=1 // pred_region
      %30 = dma.done [#allocation3], 6272
    $region21: #{single_layer_logistics.1} parent=1 // pred_fallthru
      _
    %v32 = vld [vmem:[%s0] sm:$0xff]
    %v33 = vld [vmem:[%s0 + $0x8] sm:$0xff]
    %v34 = vld [vmem:[%s0 + $0x10] sm:$0xff]
    %v35 = vld [vmem:[%s0 + $0x18] sm:$0xff]
    %v36 = vld [vmem:[%s0 + $0x20] sm:$0xff]
    %v37 = vld [vmem:[%s0 + $0x28] sm:$0xff]
    %v38 = vld [vmem:[%s0 + $0x30] sm:$0xff]
    %v39 = vpack.c.bf16 %v32, %v32
    %v40 = vpack.c.bf16 %v33, %v33
    %v41 = vpack.c.bf16 %v34, %v34
    %v42 = vpack.c.bf16 %v35, %v35
    %v43 = vpack.c.bf16 %v36, %v36
    %v44 = vpack.c.bf16 %v37, %v37
    %v45 = vpack.c.bf16 %v38, %v38
    %v46 = vld [vmem:[#allocation2] sm:$0xf]
    %v47 = vld [vmem:[#allocation2 + $0x4] sm:$0xf]
    %v48 = vld [vmem:[#allocation2 + $0x8] sm:$0xf]
    %v49 = vld [vmem:[#allocation2 + $0xc] sm:$0xf]
    %v50 = vld [vmem:[#allocation2 + $0x10] sm:$0xf]
    %v51 = vld [vmem:[#allocation2 + $0x14] sm:$0xf]
    %v52 = vld [vmem:[#allocation2 + $0x18] sm:$0xf]
    %v53 = vld [vmem:[#allocation2 + $0x1c] sm:$0xf]
    %v54 = vld [vmem:[#allocation2 + $0x20] sm:$0xf]
    %v55 = vld [vmem:[#allocation2 + $0x24] sm:$0xf]
    %v56 = vld [vmem:[#allocation2 + $0x28] sm:$0xf]
    %v57 = vld [vmem:[#allocation2 + $0x2c] sm:$0xf]
    %v58 = vld [vmem:[#allocation2 + $0x30] sm:$0xf]
    %v59 = vld [vmem:[#allocation2 + $0x34] sm:$0xf]
    %v60 = vld [vmem:[#allocation2 + $0x38] sm:$0xf]
    %v61 = vld [vmem:[#allocation2 + $0x3c] sm:$0xf]
    %v62 = vld [vmem:[#allocation2 + $0x40] sm:$0xf]
    %v63 = vld [vmem:[#allocation2 + $0x44] sm:$0xf]
    %v64 = vld [vmem:[#allocation2 + $0x48] sm:$0xf]
    %v65 = vld [vmem:[#allocation2 + $0x4c] sm:$0xf]
    %v66 = vld [vmem:[#allocation2 + $0x50] sm:$0xf]
    %v67 = vld [vmem:[#allocation2 + $0x54] sm:$0xf]
    %v68 = vld [vmem:[#allocation2 + $0x58] sm:$0xf]
    %v69 = vld [vmem:[#allocation2 + $0x5c] sm:$0xf]
    %v70 = vld [vmem:[#allocation2 + $0x60] sm:$0xf]
    %v71 = vld [vmem:[#allocation2 + $0x64] sm:$0xf]
    %v72 = vld [vmem:[#allocation2 + $0x68] sm:$0xf]
    %v73 = vld [vmem:[#allocation2 + $0x6c] sm:$0xf]
    %v74 = vld [vmem:[#allocation2 + $0x70] sm:$0xf]
    %v75 = vld [vmem:[#allocation2 + $0x74] sm:$0xf]
    %v76 = vld [vmem:[#allocation2 + $0x78] sm:$0xf]
    %v77 = vld [vmem:[#allocation2 + $0x7c] sm:$0xf]
    %v78 = vld [vmem:[#allocation2 + $0x80] sm:$0xf]
    %v79 = vld [vmem:[#allocation2 + $0x84] sm:$0xf]
    %v80 = vld [vmem:[#allocation2 + $0x88] sm:$0xf]
    %v81 = vld [vmem:[#allocation2 + $0x8c] sm:$0xf]
    %v82 = vld [vmem:[#allocation2 + $0x90] sm:$0xf]
    %v83 = vld [vmem:[#allocation2 + $0x94] sm:$0xf]
    %v84 = vld [vmem:[#allocation2 + $0x98] sm:$0xf]
    %v85 = vld [vmem:[#allocation2 + $0x9c] sm:$0xf]
    %v86 = vld [vmem:[#allocation2 + $0xa0] sm:$0xf]
    %v87 = vld [vmem:[#allocation2 + $0xa4] sm:$0xf]
    %v88 = vld [vmem:[#allocation2 + $0xa8] sm:$0xf]
    %v89 = vld [vmem:[#allocation2 + $0xac] sm:$0xf]
    %v90 = vld [vmem:[#allocation2 + $0xb0] sm:$0xf]
    %v91 = vld [vmem:[#allocation2 + $0xb4] sm:$0xf]
    %v92 = vld [vmem:[#allocation2 + $0xb8] sm:$0xf]
    %v93 = vld [vmem:[#allocation2 + $0xbc] sm:$0xf]
    %v94 = vld [vmem:[#allocation2 + $0xc0] sm:$0xf]
    %v95 = vld [vmem:[#allocation2 + $0xc4] sm:$0xf]
    %v96 = vld [vmem:[#allocation2 + $0xc8] sm:$0xf]
    %v97 = vld [vmem:[#allocation2 + $0xcc] sm:$0xf]
    %v98 = vld [vmem:[#allocation2 + $0xd0] sm:$0xf]
    %v99 = vld [vmem:[#allocation2 + $0xd4] sm:$0xf]
    %v100 = vld [vmem:[#allocation2 + $0xd8] sm:$0xf]
    %v101 = vld [vmem:[#allocation2 + $0xdc] sm:$0xf]
    %v102 = vld [vmem:[#allocation2 + $0xe0] sm:$0xf]
    %v103 = vld [vmem:[#allocation2 + $0xe4] sm:$0xf]
    %v104 = vld [vmem:[#allocation2 + $0xe8] sm:$0xf]
    %v105 = vld [vmem:[#allocation2 + $0xec] sm:$0xf]
    %v106 = vld [vmem:[#allocation2 + $0xf0] sm:$0xf]
    %v107 = vld [vmem:[#allocation2 + $0xf4] sm:$0xf]
    %v108 = vld [vmem:[#allocation2 + $0xf8] sm:$0xf]
    %v109 = vld [vmem:[#allocation2 + $0xfc] sm:$0xf]
    %v110 = vld [vmem:[#allocation2 + $0x100] sm:$0xf]
    %v111 = vld [vmem:[#allocation2 + $0x104] sm:$0xf]
    %v112 = vld [vmem:[#allocation2 + $0x108] sm:$0xf]
    %v113 = vld [vmem:[#allocation2 + $0x10c] sm:$0xf]
    %v114 = vld [vmem:[#allocation2 + $0x110] sm:$0xf]
    %v115 = vld [vmem:[#allocation2 + $0x114] sm:$0xf]
    %v116 = vld [vmem:[#allocation2 + $0x118] sm:$0xf]
    %v117 = vld [vmem:[#allocation2 + $0x11c] sm:$0xf]
    %v118 = vld [vmem:[#allocation2 + $0x120] sm:$0xf]
    %v119 = vld [vmem:[#allocation2 + $0x124] sm:$0xf]
    %v120 = vld [vmem:[#allocation2 + $0x128] sm:$0xf]
    %v121 = vld [vmem:[#allocation2 + $0x12c] sm:$0xf]
    %v122 = vld [vmem:[#allocation2 + $0x130] sm:$0xf]
    %v123 = vld [vmem:[#allocation2 + $0x134] sm:$0xf]
    %v124 = vld [vmem:[#allocation2 + $0x138] sm:$0xf]
    %v125 = vld [vmem:[#allocation2 + $0x13c] sm:$0xf]
    %v126 = vld [vmem:[#allocation2 + $0x140] sm:$0xf]
    %v127 = vld [vmem:[#allocation2 + $0x144] sm:$0xf]
    %v128 = vld [vmem:[#allocation2 + $0x148] sm:$0xf]
    %v129 = vld [vmem:[#allocation2 + $0x14c] sm:$0xf]
    %v130 = vld [vmem:[#allocation2 + $0x150] sm:$0xf]
    %v131 = vld [vmem:[#allocation2 + $0x154] sm:$0xf]
    %v132 = vld [vmem:[#allocation2 + $0x158] sm:$0xf]
    %v133 = vld [vmem:[#allocation2 + $0x15c] sm:$0xf]
    %v134 = vld [vmem:[#allocation2 + $0x160] sm:$0xf]
    %v135 = vld [vmem:[#allocation2 + $0x164] sm:$0xf]
    %v136 = vld [vmem:[#allocation2 + $0x168] sm:$0xf]
    %v137 = vld [vmem:[#allocation2 + $0x16c] sm:$0xf]
    %v138 = vld [vmem:[#allocation2 + $0x170] sm:$0xf]
    %v139 = vld [vmem:[#allocation2 + $0x174] sm:$0xf]
    %v140 = vld [vmem:[#allocation2 + $0x178] sm:$0xf]
    %v141 = vld [vmem:[#allocation2 + $0x17c] sm:$0xf]
    %v142 = vld [vmem:[#allocation2 + $0x180] sm:$0xf]
    %v143 = vld [vmem:[#allocation2 + $0x184] sm:$0xf]
    %v144 = vld [vmem:[%s2] sm:$0x1]
    %v146 = vlaneseq
    %v147 = vshrl.u32 %v146, 7
    %v148 = vsub.s32 0, %v147
    %v149 = vrot.slane %v144, %v148
    %v249 = vunpack.c.l.b16 %v46
    %v250 = vunpack.c.l.b16 %v47
    %v251 = vunpack.c.l.b16 %v48
    %v252 = vunpack.c.l.b16 %v49
    %v253 = vunpack.c.l.b16 %v50
    %v254 = vunpack.c.l.b16 %v51
    %v255 = vunpack.c.l.b16 %v52
    %v256 = vunpack.c.l.b16 %v53
    %v257 = vunpack.c.l.b16 %v54
    %v258 = vunpack.c.l.b16 %v55
    %v259 = vunpack.c.l.b16 %v56
    %v260 = vunpack.c.l.b16 %v57
    %v261 = vunpack.c.l.b16 %v58
    %v262 = vunpack.c.l.b16 %v59
    %v263 = vunpack.c.l.b16 %v60
    %v264 = vunpack.c.l.b16 %v61
    %v265 = vunpack.c.l.b16 %v62
    %v266 = vunpack.c.l.b16 %v63
    %v267 = vunpack.c.l.b16 %v64
    %v268 = vunpack.c.l.b16 %v65
    %v269 = vunpack.c.l.b16 %v66
    %v270 = vunpack.c.l.b16 %v67
    %v271 = vunpack.c.l.b16 %v68
    %v272 = vunpack.c.l.b16 %v69
    %v273 = vunpack.c.l.b16 %v70
    %v274 = vunpack.c.l.b16 %v71
    %v275 = vunpack.c.l.b16 %v72
    %v276 = vunpack.c.l.b16 %v73
    %v277 = vunpack.c.l.b16 %v74
    %v278 = vunpack.c.l.b16 %v75
    %v279 = vunpack.c.l.b16 %v76
    %v280 = vunpack.c.l.b16 %v77
    %v281 = vunpack.c.l.b16 %v78
    %v282 = vunpack.c.l.b16 %v79
    %v283 = vunpack.c.l.b16 %v80
    %v284 = vunpack.c.l.b16 %v81
    %v285 = vunpack.c.l.b16 %v82
    %v286 = vunpack.c.l.b16 %v83
    %v287 = vunpack.c.l.b16 %v84
    %v288 = vunpack.c.l.b16 %v85
    %v289 = vunpack.c.l.b16 %v86
    %v290 = vunpack.c.l.b16 %v87
    %v291 = vunpack.c.l.b16 %v88
    %v292 = vunpack.c.l.b16 %v89
    %v293 = vunpack.c.l.b16 %v90
    %v294 = vunpack.c.l.b16 %v91
    %v295 = vunpack.c.l.b16 %v92
    %v296 = vunpack.c.l.b16 %v93
    %v297 = vunpack.c.l.b16 %v94
    %v298 = vunpack.c.l.b16 %v95
    %v299 = vunpack.c.l.b16 %v96
    %v300 = vunpack.c.l.b16 %v97
    %v301 = vunpack.c.l.b16 %v98
    %v302 = vunpack.c.l.b16 %v99
    %v303 = vunpack.c.l.b16 %v100
    %v304 = vunpack.c.l.b16 %v101
    %v305 = vunpack.c.l.b16 %v102
    %v306 = vunpack.c.l.b16 %v103
    %v307 = vunpack.c.l.b16 %v104
    %v308 = vunpack.c.l.b16 %v105
    %v309 = vunpack.c.l.b16 %v106
    %v310 = vunpack.c.l.b16 %v107
    %v311 = vunpack.c.l.b16 %v108
    %v312 = vunpack.c.l.b16 %v109
    %v313 = vunpack.c.l.b16 %v110
    %v314 = vunpack.c.l.b16 %v111
    %v315 = vunpack.c.l.b16 %v112
    %v316 = vunpack.c.l.b16 %v113
    %v317 = vunpack.c.l.b16 %v114
    %v318 = vunpack.c.l.b16 %v115
    %v319 = vunpack.c.l.b16 %v116
    %v320 = vunpack.c.l.b16 %v117
    %v321 = vunpack.c.l.b16 %v118
    %v322 = vunpack.c.l.b16 %v119
    %v323 = vunpack.c.l.b16 %v120
    %v324 = vunpack.c.l.b16 %v121
    %v325 = vunpack.c.l.b16 %v122
    %v326 = vunpack.c.l.b16 %v123
    %v327 = vunpack.c.l.b16 %v124
    %v328 = vunpack.c.l.b16 %v125
    %v329 = vunpack.c.l.b16 %v126
    %v330 = vunpack.c.l.b16 %v127
    %v331 = vunpack.c.l.b16 %v128
    %v332 = vunpack.c.l.b16 %v129
    %v333 = vunpack.c.l.b16 %v130
    %v334 = vunpack.c.l.b16 %v131
    %v335 = vunpack.c.l.b16 %v132
    %v336 = vunpack.c.l.b16 %v133
    %v337 = vunpack.c.l.b16 %v134
    %v338 = vunpack.c.l.b16 %v135
    %v339 = vunpack.c.l.b16 %v136
    %v340 = vunpack.c.l.b16 %v137
    %v341 = vunpack.c.l.b16 %v138
    %v342 = vunpack.c.l.b16 %v139
    %v343 = vunpack.c.l.b16 %v140
    %v344 = vunpack.c.l.b16 %v141
    %v345 = vunpack.c.l.b16 %v142
    %v346 = vunpack.c.l.b16 %v143
    %v347 = vpack.c.b16 %v250, %v249
    %v348 = vpack.c.b16 %v252, %v251
    %v349 = vpack.c.b16 %v254, %v253
    %v350 = vpack.c.b16 %v256, %v255
    %v351 = vpack.c.b16 %v258, %v257
    %v352 = vpack.c.b16 %v260, %v259
    %v353 = vpack.c.b16 %v262, %v261
    %v354 = vpack.c.b16 %v264, %v263
    %v355 = vpack.c.b16 %v266, %v265
    %v356 = vpack.c.b16 %v268, %v267
    %v357 = vpack.c.b16 %v270, %v269
    %v358 = vpack.c.b16 %v272, %v271
    %v359 = vpack.c.b16 %v274, %v273
    %v360 = vpack.c.b16 %v276, %v275
    %v361 = vpack.c.b16 %v278, %v277
    %v362 = vpack.c.b16 %v280, %v279
    %v363 = vpack.c.b16 %v282, %v281
    %v364 = vpack.c.b16 %v284, %v283
    %v365 = vpack.c.b16 %v286, %v285
    %v366 = vpack.c.b16 %v288, %v287
    %v367 = vpack.c.b16 %v290, %v289
    %v368 = vpack.c.b16 %v292, %v291
    %v369 = vpack.c.b16 %v294, %v293
    %v370 = vpack.c.b16 %v296, %v295
    %v371 = vpack.c.b16 %v298, %v297
    %v372 = vpack.c.b16 %v300, %v299
    %v373 = vpack.c.b16 %v302, %v301
    %v374 = vpack.c.b16 %v304, %v303
    %v375 = vpack.c.b16 %v306, %v305
    %v376 = vpack.c.b16 %v308, %v307
    %v377 = vpack.c.b16 %v310, %v309
    %v378 = vpack.c.b16 %v312, %v311
    %v379 = vpack.c.b16 %v314, %v313
    %v380 = vpack.c.b16 %v316, %v315
    %v381 = vpack.c.b16 %v318, %v317
    %v382 = vpack.c.b16 %v320, %v319
    %v383 = vpack.c.b16 %v322, %v321
    %v384 = vpack.c.b16 %v324, %v323
    %v385 = vpack.c.b16 %v326, %v325
    %v386 = vpack.c.b16 %v328, %v327
    %v387 = vpack.c.b16 %v330, %v329
    %v388 = vpack.c.b16 %v332, %v331
    %v389 = vpack.c.b16 %v334, %v333
    %v390 = vpack.c.b16 %v336, %v335
    %v391 = vpack.c.b16 %v338, %v337
    %v392 = vpack.c.b16 %v340, %v339
    %v393 = vpack.c.b16 %v342, %v341
    %v394 = vpack.c.b16 %v344, %v343
    %v395 = vpack.c.b16 %v346, %v345
    %vm445 = vcmask 130048
    %v447 = vsel %vm445, %v45, 0
    %449 = vmatprep.subr.bf16.mxu0 0
    %450 = vmatpush1.bf16.msra.mxu0 %v347
    %451 = vmatprep.subr.bf16.mxu0 0
    %452 = vmatpush1.bf16.msra.mxu0 %v348
    %453 = vmatprep.subr.bf16.mxu0 0
    %454 = vmatpush1.bf16.msra.mxu0 %v349
    %455 = vmatprep.subr.bf16.mxu0 0
    %456 = vmatpush1.bf16.msra.mxu0 %v350
    %457 = vmatprep.subr.bf16.mxu0 0
    %458 = vmatpush1.bf16.msra.mxu0 %v351
    %459 = vmatprep.subr.bf16.mxu0 0
    %460 = vmatpush1.bf16.msra.mxu0 %v352
    %461 = vmatprep.subr.bf16.mxu0 0
    %462 = vmatpush1.bf16.msra.mxu0 %v353
    %463 = vmatprep.subr.bf16.mxu0 0
    %464 = vmatpush1.bf16.msra.mxu0 %v354
    %465 = vmatprep.subr.bf16.mxu0 0
    %466 = vmatpush1.bf16.msra.mxu0 %v355
    %467 = vmatprep.subr.bf16.mxu0 0
    %468 = vmatpush1.bf16.msra.mxu0 %v356
    %469 = vmatprep.subr.bf16.mxu0 0
    %470 = vmatpush1.bf16.msra.mxu0 %v357
    %471 = vmatprep.subr.bf16.mxu0 0
    %472 = vmatpush1.bf16.msra.mxu0 %v358
    %473 = vmatprep.subr.bf16.mxu0 0
    %474 = vmatpush1.bf16.msra.mxu0 %v359
    %475 = vmatprep.subr.bf16.mxu0 0
    %476 = vmatpush1.bf16.msra.mxu0 %v360
    %477 = vmatprep.subr.bf16.mxu0 0
    %478 = vmatpush1.bf16.msra.mxu0 %v361
    %479 = vmatprep.subr.bf16.mxu0 0
    %480 = vmatpush1.bf16.msra.mxu0 %v362
    %481 = vmatprep.mubr.bf16.mxu0 %v40
    %482 = vmatmul.mubr.bf16.gmra.mrb[0].mxu0 %v39
    %v483 = vpop.f32.mrb[0].mxu0
    %v484 = vadd.f32 %v149, %v483
    %v485 = vpop.f32.mrb[0].mxu0
    %v486 = vpop.f32.mrb[0].mxu0
    %v487 = vpop.f32.mrb[0].mxu0
    %488 = vdwg.mxu0
    %489 = vmatprep.subr.bf16.mxu0 0
    %490 = vmatpush1.bf16.msra.mxu0 %v363
    %491 = vmatprep.subr.bf16.mxu0 0
    %492 = vmatpush1.bf16.msra.mxu0 %v364
    %493 = vmatprep.subr.bf16.mxu0 0
    %494 = vmatpush1.bf16.msra.mxu0 %v365
    %495 = vmatprep.subr.bf16.mxu0 0
    %496 = vmatpush1.bf16.msra.mxu0 %v366
    %497 = vmatprep.subr.bf16.mxu0 0
    %498 = vmatpush1.bf16.msra.mxu0 %v367
    %499 = vmatprep.subr.bf16.mxu0 0
    %500 = vmatpush1.bf16.msra.mxu0 %v368
    %501 = vmatprep.subr.bf16.mxu0 0
    %502 = vmatpush1.bf16.msra.mxu0 %v369
    %503 = vmatprep.subr.bf16.mxu0 0
    %504 = vmatpush1.bf16.msra.mxu0 %v370
    %505 = vmatprep.subr.bf16.mxu0 0
    %506 = vmatpush1.bf16.msra.mxu0 %v371
    %507 = vmatprep.subr.bf16.mxu0 0
    %508 = vmatpush1.bf16.msra.mxu0 %v372
    %509 = vmatprep.subr.bf16.mxu0 0
    %510 = vmatpush1.bf16.msra.mxu0 %v373
    %511 = vmatprep.subr.bf16.mxu0 0
    %512 = vmatpush1.bf16.msra.mxu0 %v374
    %513 = vmatprep.subr.bf16.mxu0 0
    %514 = vmatpush1.bf16.msra.mxu0 %v375
    %515 = vmatprep.subr.bf16.mxu0 0
    %516 = vmatpush1.bf16.msra.mxu0 %v376
    %517 = vmatprep.subr.bf16.mxu0 0
    %518 = vmatpush1.bf16.msra.mxu0 %v377
    %519 = vmatprep.subr.bf16.mxu0 0
    %520 = vmatpush1.bf16.msra.mxu0 %v378
    %521 = vmatprep.mubr.bf16.mxu0 %v42
    %522 = vmatmul.mubr.bf16.gmra.mrb[0].mxu0 %v41
    %v523 = vpop.f32.mrb[0].mxu0
    %v524 = vadd.f32 %v484, %v523
    %v525 = vpop.f32.mrb[0].mxu0
    %v526 = vpop.f32.mrb[0].mxu0
    %v527 = vpop.f32.mrb[0].mxu0
    %528 = vdwg.mxu0
    %529 = vmatprep.subr.bf16.mxu0 0
    %530 = vmatpush1.bf16.msra.mxu0 %v379
    %531 = vmatprep.subr.bf16.mxu0 0
    %532 = vmatpush1.bf16.msra.mxu0 %v380
    %533 = vmatprep.subr.bf16.mxu0 0
    %534 = vmatpush1.bf16.msra.mxu0 %v381
    %535 = vmatprep.subr.bf16.mxu0 0
    %536 = vmatpush1.bf16.msra.mxu0 %v382
    %537 = vmatprep.subr.bf16.mxu0 0
    %538 = vmatpush1.bf16.msra.mxu0 %v383
    %539 = vmatprep.subr.bf16.mxu0 0
    %540 = vmatpush1.bf16.msra.mxu0 %v384
    %541 = vmatprep.subr.bf16.mxu0 0
    %542 = vmatpush1.bf16.msra.mxu0 %v385
    %543 = vmatprep.subr.bf16.mxu0 0
    %544 = vmatpush1.bf16.msra.mxu0 %v386
    %545 = vmatprep.subr.bf16.mxu0 0
    %546 = vmatpush1.bf16.msra.mxu0 %v387
    %547 = vmatprep.subr.bf16.mxu0 0
    %548 = vmatpush1.bf16.msra.mxu0 %v388
    %549 = vmatprep.subr.bf16.mxu0 0
    %550 = vmatpush1.bf16.msra.mxu0 %v389
    %551 = vmatprep.subr.bf16.mxu0 0
    %552 = vmatpush1.bf16.msra.mxu0 %v390
    %553 = vmatprep.subr.bf16.mxu0 0
    %554 = vmatpush1.bf16.msra.mxu0 %v391
    %555 = vmatprep.subr.bf16.mxu0 0
    %556 = vmatpush1.bf16.msra.mxu0 %v392
    %557 = vmatprep.subr.bf16.mxu0 0
    %558 = vmatpush1.bf16.msra.mxu0 %v393
    %559 = vmatprep.subr.bf16.mxu0 0
    %560 = vmatpush1.bf16.msra.mxu0 %v394
    %561 = vmatprep.mubr.bf16.mxu0 %v44
    %562 = vmatmul.mubr.bf16.gmra.mrb[0].mxu0 %v43
    %v563 = vpop.f32.mrb[0].mxu0
    %v564 = vadd.f32 %v524, %v563
    %v565 = vpop.f32.mrb[0].mxu0
    %v566 = vpop.f32.mrb[0].mxu0
    %v567 = vpop.f32.mrb[0].mxu0
    %568 = vdwg.mxu0
    %569 = vmatprep.subr.bf16.mxu0 0
    %570 = vmatpush1.bf16.msra.mxu0 %v395
    %571 = vmatprep.subr.bf16.mxu0 0
    %572 = vmatpush1.bf16.msra.mxu0 0
    %573 = vmatprep.subr.bf16.mxu0 0
    %574 = vmatpush1.bf16.msra.mxu0 0
    %575 = vmatprep.subr.bf16.mxu0 0
    %576 = vmatpush1.bf16.msra.mxu0 0
    %577 = vmatprep.subr.bf16.mxu0 0
    %578 = vmatpush1.bf16.msra.mxu0 0
    %579 = vmatprep.subr.bf16.mxu0 0
    %580 = vmatpush1.bf16.msra.mxu0 0
    %581 = vmatprep.subr.bf16.mxu0 0
    %582 = vmatpush1.bf16.msra.mxu0 0
    %583 = vmatprep.subr.bf16.mxu0 0
    %584 = vmatpush1.bf16.msra.mxu0 0
    %585 = vmatprep.subr.bf16.mxu0 0
    %586 = vmatpush1.bf16.msra.mxu0 0
    %587 = vmatprep.subr.bf16.mxu0 0
    %588 = vmatpush1.bf16.msra.mxu0 0
    %589 = vmatprep.subr.bf16.mxu0 0
    %590 = vmatpush1.bf16.msra.mxu0 0
    %591 = vmatprep.subr.bf16.mxu0 0
    %592 = vmatpush1.bf16.msra.mxu0 0
    %593 = vmatprep.subr.bf16.mxu0 0
    %594 = vmatpush1.bf16.msra.mxu0 0
    %595 = vmatprep.subr.bf16.mxu0 0
    %596 = vmatpush1.bf16.msra.mxu0 0
    %597 = vmatprep.subr.bf16.mxu0 0
    %598 = vmatpush1.bf16.msra.mxu0 0
    %599 = vmatprep.subr.bf16.mxu0 0
    %600 = vmatpush1.bf16.msra.mxu0 0
    %601 = vmatprep.mubr.bf16.mxu0 0
    %602 = vmatmul.mubr.bf16.gmra.mrb[0].mxu0 %v447
    %v603 = vpop.f32.mrb[0].mxu0
    %v604 = vadd.f32 %v564, %v603
    %v605 = vpop.f32.mrb[0].mxu0
    %v606 = vpop.f32.mrb[0].mxu0
    %v607 = vpop.f32.mrb[0].mxu0
    %608 = vdwg.mxu0
    %v609 = vmax.f32 %v604, 0.0
    %v610 = vld [vmem:[%s3] sm:$0x1]
    %v612 = vlaneseq
    %v613 = vshrl.u32 %v612, 7
    %v614 = vsub.s32 0, %v613
    %v615 = vrot.slane %v610, %v614
    %v617 = vadd.f32 %v609, %v615
    %618 = vmax.xlane.f32.xlu0 %v617
    %v619 = vpop.xlane.xlu0 %618
    %v620 = vsub.f32 %v617, %v619
    %v621 = vmul.f32 %v620, 1.442695
    %v622 = vpow.pop %v621
    %623 = vadd.xlane.f32.xlu0 %v622
    %v624 = vpop.xlane.xlu0 %623
    %v625 = vlog2.pop %v624
    %v626 = vmul.f32 %v625, 0.6931472
    %v627 = vsub.f32 %v620, %v626
    %v628 = vpack.c.bf16 %v627, %v627
    %629 = vst [vmem:[%s4] sm:$0xf] %v628
    // Predicated region
    $region22: #{single_layer_logistics.1} parent=1 // pred_check
      _
    $region23: #{single_layer_logistics.1} parent=1 // pred_check_branch
      %631 = sbr.rel (0) target = $region25
    $region24: #{single_layer_logistics.1} parent=1 // pred_region
      _
    $region25: #{single_layer_logistics.1} parent=1 // pred_fallthru
      _
    // Predicated region
    $region26: #{single_layer_logistics.1} parent=1 // pred_check
      _
    $region27: #{single_layer_logistics.1} parent=1 // pred_check_branch
      %633 = sbr.rel (0) target = $region29
    $region28: #{single_layer_logistics.1} parent=1 // pred_region
      _
    $region29: #{single_layer_logistics.1} parent=1 // pred_fallthru
      _
    %634 = vsyncpa [#allocation3], 1

</llo_original>
